<compile_context>
chip_gen: v6e
topology: v6e:2x2x1
jax: 0.10.0
libtpu: 0.0.40
codegen_flags: <defaults>
</compile_context>

<pallas_src>
import functools
import math

import jax
import jax.numpy as jnp
from jax import lax
from jax.experimental import pallas as pl
from jax.experimental.pallas import tpu as pltpu

GAMMA = 2.0
LANE = 128


def _round_up(n, m):
    return -(-n // m) * m


def _log_sigmoid(z):
    # Numerically stable log(sigmoid(z)) = min(z, 0) - log1p(exp(-|z|))
    return jnp.minimum(z, 0.0) - jnp.log1p(jnp.exp(-jnp.abs(z)))


def _focal_elementwise(x, t, gamma):
    """Plain-XLA per-element sigmoid focal loss (reference + <128-elem tail)."""
    x = x.astype(jnp.float32)
    t = t.astype(jnp.float32)
    ce = x - x * t - _log_sigmoid(x)
    invprobs = _log_sigmoid(-x * (2.0 * t - 1.0))
    return jnp.exp(invprobs * gamma) * ce


def _detect_num_cores():
    """TensorCores per chip (2 on v7x, 1 on v5e/v6e). Conservative fallback 1."""
    try:
        info = pltpu.get_tpu_info()
    except Exception:
        return 1
    for name in ("num_cores", "core_count", "num_tensorcores", "tensorcore_count"):
        v = getattr(info, name, None)
        if v is None:
            continue
        try:
            v = int(v)
        except Exception:
            continue
        if 1 <= v <= 16:
            return min(v, 2)
    return 1


def _focal_sum_kernel(x_ref, t_ref, out_ref, *, gamma, binary_target,
                      rows, tm, slab, tiles_per_core):
    """Streaming sigmoid-focal-loss partial sums.

    Each grid step loads a (tm, 128) block of preds/targets, processes it in
    (slab, 128) sub-slabs (bounded intermediates), masks rows past the valid
    element count (partial last block / dead rounded grid slots) and folds the
    result onto an (8, 128) vreg-shaped accumulator carried in the output
    block, which is resident across the inner ("arbitrary") grid axis.
    """
    c = pl.program_id(0)
    j = pl.program_id(1)

    @pl.when(j == 0)
    def _():
        out_ref[...] = jnp.zeros_like(out_ref)

    # Linear block id.  May exceed the number of real blocks when the grid is
    # rounded up for the multi-core split; the index_map clamps the DMA and
    # the mask below zeroes the contribution.
    blk = c * tiles_per_core + j
    valid = jnp.clip(rows - blk * tm, 0, tm)      # valid rows in this block

    n_slabs = tm // slab
    row_iota = lax.broadcasted_iota(jnp.int32, (slab, LANE), 0)  # hoisted

    def body(i, acc):
        r0 = pl.multiple_of(i * slab, slab)
        x = x_ref[pl.ds(r0, slab), :].astype(jnp.float32)
        t = t_ref[pl.ds(r0, slab), :].astype(jnp.float32)

        if binary_target:
            # For t in {0,1}: |x*(2t-1)| == |x|, so the BCE term and the focal
            # log-prob term share one exp and one log1p (5 -> 3 EUP/element).
            e = jnp.exp(-jnp.abs(x))                        # EUP
            l = jnp.log1p(e)                                # EUP
            ce = jnp.maximum(x, 0.0) - x * t + l            # == x - x*t - logsigmoid(x)
            invprobs = -jnp.maximum(x * (2.0 * t - 1.0), 0.0) - l
            # TODO(synk): if v7x/bf16 profiles EUP-bound, replace the exp below
            # with e*e / (1+e)^2 via pl.reciprocal(approx=True) for gamma==2.
        else:
            # General (soft-target) path: exact for arbitrary t.
            ce = x - x * t - _log_sigmoid(x)
            invprobs = _log_sigmoid(-x * (2.0 * t - 1.0))

        loss = jnp.exp(invprobs * gamma) * ce               # EUP

        # Mask garbage rows of the (possibly partial / dead) block.
        mask = (row_iota + i * slab) < valid
        loss = jnp.where(mask, loss, 0.0)

        # Fold (slab, 128) onto an (8, 128) carry with plain VPU adds
        # (no per-step XLU reduction, no serialized scalar RMW).
        return acc + loss.reshape(slab // 8, 8, LANE).sum(axis=0)

    acc = lax.fori_loop(0, n_slabs, body,
                        jnp.zeros((8, LANE), jnp.float32), unroll=True)
    out_ref[...] += acc[None]


def focal_loss_3d(pred, target, *, gamma=GAMMA, include_background=True,
                  reduction="mean", binary_target=None,
                  tile_rows=None, num_cores=None):
    """FocalLoss3D forward (sigmoid focal loss, PyTorch-module defaults).

    pred, target: (B, C, D, H, W), same shape (one-hot style target).  Targets
    may be int8/bool/bf16 and preds bf16 — everything is cast to f32 inside the
    kernel, so narrow call-site dtypes directly cut HBM traffic.

    binary_target=None (default) auto-selects: the reduced-transcendental path
    is used only for integer/bool targets (guaranteed in {0,1}); float targets
    take the general path unless the caller explicitly passes True.
    """
    # TODO(synk): alpha class weighting, use_softmax=True variant and
    # reduction='none' (elementwise output) are not implemented here.
    if not include_background and pred.shape[1] > 1:
        pred = pred[:, 1:]
        target = target[:, 1:]
    if pred.shape != target.shape:
        raise ValueError("ground truth must match input shape")
    if reduction not in ("mean", "sum"):
        raise ValueError(f"Unsupported reduction: {reduction}")

    if binary_target is None:
        binary_target = bool(jnp.issubdtype(target.dtype, jnp.integer)
                             or jnp.issubdtype(target.dtype, jnp.bool_))

    total_n = math.prod(pred.shape)
    x_flat = pred.reshape(-1)          # contiguous reshape: free (bitcast)
    t_flat = target.reshape(-1)

    rows = total_n // LANE
    rem = total_n - rows * LANE
    tail_sum = jnp.float32(0.0)
    if rem:
        # Sub-lane tail (<128 elems) summed with plain XLA.  NOTE: this branch
        # also forces one prefix-slice copy of the main slab; 128-aligned
        # totals (the common case) stay fully copy-free.
        tail_sum = jnp.sum(_focal_elementwise(x_flat[rows * LANE:],
                                              t_flat[rows * LANE:], gamma))
        if rows:
            x_flat = x_flat[: rows * LANE]
            t_flat = t_flat[: rows * LANE]

    if rows == 0:
        total = tail_sum
    else:
        x2 = x_flat.reshape(rows, LANE)
        t2 = t_flat.reshape(rows, LANE)

        # --- tile selection: ~8 MiB of combined input per grid step, capped.
        if tile_rows is None:
            per_row_bytes = LANE * (x2.dtype.itemsize + t2.dtype.itemsize)
            tile_rows = max(512, min(8192, ((8 << 20) // per_row_bytes) // 512 * 512))
        tm = min(int(tile_rows), _round_up(rows, 32))
        tm = _round_up(tm, 32)                       # sublane-pack safe for i8/bf16
        if tm % 512 == 0:
            slab = 512
        elif tm % 256 == 0:
            slab = 256
        else:
            slab = tm
        n_blocks = pl.cdiv(rows, tm)

        if num_cores is None:
            num_cores = _detect_num_cores()
        num_cores = max(1, min(int(num_cores), n_blocks))
        tiles_per_core = pl.cdiv(n_blocks, num_cores)

        # Explicit scoped-VMEM budget for the enlarged, double-buffered blocks.
        blk_bytes = tm * LANE * (x2.dtype.itemsize + t2.dtype.itemsize)
        vmem_limit = int(min(max(2 * blk_bytes + (8 << 20), 16 << 20), 48 << 20))

        kernel = functools.partial(
            _focal_sum_kernel, gamma=float(gamma),
            binary_target=bool(binary_target),
            rows=rows, tm=tm, slab=slab, tiles_per_core=tiles_per_core)

        def in_map(c, j, tpc=tiles_per_core, nb=n_blocks):
            # Clamp dead (rounded-up) grid slots onto the last real block;
            # the kernel masks their contribution to exactly zero.
            return (jnp.minimum(c * tpc + j, nb - 1), 0)

        cost = pl.CostEstimate(
            flops=12 * rows * LANE,
            transcendentals=(3 if binary_target else 5) * rows * LANE,
            bytes_accessed=(x2.size * x2.dtype.itemsize
                            + t2.size * t2.dtype.itemsize
                            + num_cores * 8 * LANE * 4),
        )

        partials = pl.pallas_call(
            kernel,
            out_shape=jax.ShapeDtypeStruct((num_cores, 8, LANE), jnp.float32),
            grid_spec=pltpu.PrefetchScalarGridSpec(
                num_scalar_prefetch=0,
                grid=(num_cores, tiles_per_core),
                in_specs=[pl.BlockSpec((tm, LANE), in_map),
                          pl.BlockSpec((tm, LANE), in_map)],
                out_specs=pl.BlockSpec((1, 8, LANE), lambda c, j: (c, 0, 0)),
            ),
            compiler_params=pltpu.CompilerParams(
                dimension_semantics=("parallel", "arbitrary"),
                vmem_limit_bytes=vmem_limit,
            ),
            cost_estimate=cost,
        )(x2, t2)

        # Final cross-lane reduce done by XLA.  (f32 running accumulation can
        # drift for >~1e9-element volumes; acceptable for a mean loss.)
        total = jnp.sum(partials) + tail_sum

    if reduction == "mean":
        return total / jnp.float32(total_n)
    return total                         # reduction == "sum"


def focal_loss_3d_ref(pred, target, gamma=GAMMA):
    return jnp.mean(_focal_elementwise(pred, target, gamma))


if __name__ == "__main__":
    key = jax.random.PRNGKey(0)
    k1, k2, k3 = jax.random.split(key, 3)

    B, C, D, H, W = 2, 3, 8, 16, 16          # small 3-D segmentation-style shape
    shape = (B, C, D, H, W)
    logits = jax.random.normal(k1, shape, dtype=jnp.float32)
    labels = jax.random.randint(k2, shape, 0, 2).astype(jnp.float32)
    ref = focal_loss_3d_ref(logits, labels)

    # 1) float {0,1} targets -> auto general path, 128-aligned (copy-free)
    out = jax.block_until_ready(focal_loss_3d(logits, labels))
    assert jnp.allclose(out, ref, rtol=1e-5, atol=1e-5), (out, ref)

    # 2) explicit binary fast path (3 transcendentals / element)
    out = jax.block_until_ready(focal_loss_3d(logits, labels, binary_target=True))
    assert jnp.allclose(out, ref, rtol=1e-5, atol=1e-5), (out, ref)

    # 3) soft targets -> general path
    soft = jax.random.uniform(k3, shape, dtype=jnp.float32)
    ref_soft = focal_loss_3d_ref(logits, soft)
    out = jax.block_until_ready(focal_loss_3d(logits, soft))
    assert jnp.allclose(out, ref_soft, rtol=1e-5, atol=1e-5), (out, ref_soft)

    # 4) bf16 preds + bf16 targets (narrow HBM streams, in-kernel f32 cast)
    lg_bf, tg_bf = logits.astype(jnp.bfloat16), labels.astype(jnp.bfloat16)
    ref_bf = focal_loss_3d_ref(lg_bf, tg_bf)
    out = jax.block_until_ready(focal_loss_3d(lg_bf, tg_bf))
    assert jnp.allclose(out, ref_bf, rtol=1e-5, atol=1e-5), (out, ref_bf)

    # 5) int8 one-hot targets -> auto binary path, 1-byte target stream
    out = jax.block_until_ready(focal_loss_3d(logits, labels.astype(jnp.int8)))
    assert jnp.allclose(out, ref, rtol=1e-5, atol=1e-5), (out, ref)

    # 6) total not a multiple of 128 -> XLA tail + in-kernel row masking
    shp2 = (1, 2, 5, 10, 13)
    lg2 = jax.random.normal(k1, shp2, dtype=jnp.float32)
    tg2 = jax.random.randint(k2, shp2, 0, 2).astype(jnp.float32)
    ref2 = focal_loss_3d_ref(lg2, tg2)
    out = jax.block_until_ready(focal_loss_3d(lg2, tg2))
    assert jnp.allclose(out, ref2, rtol=1e-5, atol=1e-5), (out, ref2)

    # 7) partial last block (rows % tm != 0) exercises the iota mask
    out = jax.block_until_ready(focal_loss_3d(logits, labels, tile_rows=64))
    assert jnp.allclose(out, ref, rtol=1e-5, atol=1e-5), (out, ref)

    # 8) multi-core grid split incl. a dead rounded slot (serial on 1-TC chips)
    out = jax.block_until_ready(
        focal_loss_3d(logits, labels, tile_rows=32, num_cores=2))
    assert jnp.allclose(out, ref, rtol=1e-5, atol=1e-5), (out, ref)

    print("KERNEL_OK")
</pallas_src>

<mosaic_0001>
module attributes {stable_mosaic.version = 11 : i64} {
  func.func @_focal_sum_kernel(%arg0: i32, %arg1: i32, %arg2: memref<96x128xf32, #tpu.memory_space<vmem>>, %arg3: memref<96x128xf32, #tpu.memory_space<vmem>>, %arg4: memref<1x8x128xf32, #tpu.memory_space<vmem>>) attributes {dimension_semantics = [#tpu.dimension_semantics<parallel>, #tpu.dimension_semantics<arbitrary>], iteration_bounds = array<i64: 1, 1>, scalar_prefetch = 0 : i64, scratch_operands = 0 : i64, tpu.core_type = #tpu.core_type<tc>, window_params = [{transform_indices = @transform_0, window_bounds = array<i64: 96, 128>}, {transform_indices = @transform_1, window_bounds = array<i64: 96, 128>}, {transform_indices = @transform_2, window_bounds = array<i64: 1, 8, 128>}]} {
    %c0_i32 = arith.constant 0 : i32
    %0 = arith.cmpi eq, %arg1, %c0_i32 : i32
    %1 = arith.extui %0 : i1 to i32
    %c0_i32_0 = arith.constant 0 : i32
    %2 = arith.cmpi ne, %1, %c0_i32_0 : i32
    scf.if %2 {
      %cst_25 = arith.constant 0.000000e+00 : f32
      %61 = vector.broadcast %cst_25 : f32 to vector<1x8x128xf32>
      %c0_26 = arith.constant 0 : index
      %c0_27 = arith.constant 0 : index
      %c0_28 = arith.constant 0 : index
      %62 = vector.load %arg4[%c0_26, %c0_27, %c0_28] : memref<1x8x128xf32, #tpu.memory_space<vmem>>, vector<1x8x128xf32>
      tpu.vector_store %arg4[%c0_26, %c0_27, %c0_28], %61 {strides = array<i32>} : memref<1x8x128xf32, #tpu.memory_space<vmem>>, vector<1x8x128xf32>,
    } else {
    }
    %c1_i32 = arith.constant 1 : i32
    %3 = arith.muli %arg0, %c1_i32 : i32
    %4 = arith.addi %3, %arg1 : i32
    %c96_i32 = arith.constant 96 : i32
    %5 = arith.muli %4, %c96_i32 : i32
    %c96_i32_1 = arith.constant 96 : i32
    %6 = arith.subi %c96_i32_1, %5 : i32
    %c0_i32_2 = arith.constant 0 : i32
    %c96_i32_3 = arith.constant 96 : i32
    %7 = arith.maxsi %c0_i32_2, %6 : i32
    %8 = arith.minsi %c96_i32_3, %7 : i32
    %9 = tpu.iota {dimensions = array<i32: 0>} : vector<96x128xi32>
    %cst = arith.constant 0.000000e+00 : f32
    %10 = vector.broadcast %cst : f32 to vector<8x128xf32>
    %c0_i32_4 = arith.constant 0 : i32
    %c96_i32_5 = arith.constant 96 : i32
    %11 = arith.muli %c0_i32_4, %c96_i32_5 : i32
    %12 = tpu.assume_multiple %11, 96 : i32
    %13 = arith.index_cast %12 : i32 to index
    %c0 = arith.constant 0 : index
    %14 = vector.load %arg2[%13, %c0] : memref<96x128xf32, #tpu.memory_space<vmem>>, vector<96x128xf32>
    %15 = arith.index_cast %12 : i32 to index
    %c0_6 = arith.constant 0 : index
    %16 = vector.load %arg3[%15, %c0_6] : memref<96x128xf32, #tpu.memory_space<vmem>>, vector<96x128xf32>
    %17 = arith.mulf %14, %16 : vector<96x128xf32>
    %18 = arith.subf %14, %17 : vector<96x128xf32>
    %cst_7 = arith.constant 0.000000e+00 : f32
    %19 = vector.broadcast %cst_7 : f32 to vector<96x128xf32>
    %20 = arith.minimumf %14, %19 : vector<96x128xf32>
    %21 = math.absf %14 : vector<96x128xf32>
    %cst_8 = arith.constant 0.000000e+00 : f32
    %22 = vector.broadcast %cst_8 : f32 to vector<96x128xf32>
    %23 = arith.subf %22, %21 : vector<96x128xf32>
    %24 = math.exp %23 : vector<96x128xf32>
    %25 = math.log1p %24 : vector<96x128xf32>
    %26 = arith.subf %20, %25 : vector<96x128xf32>
    %27 = arith.subf %18, %26 : vector<96x128xf32>
    %cst_9 = arith.constant 0.000000e+00 : f32
    %28 = vector.broadcast %cst_9 : f32 to vector<96x128xf32>
    %29 = arith.subf %28, %14 : vector<96x128xf32>
    %cst_10 = arith.constant 2.000000e+00 : f32
    %30 = vector.broadcast %cst_10 : f32 to vector<96x128xf32>
    %31 = arith.mulf %30, %16 : vector<96x128xf32>
    %cst_11 = arith.constant 1.000000e+00 : f32
    %32 = vector.broadcast %cst_11 : f32 to vector<96x128xf32>
    %33 = arith.subf %31, %32 : vector<96x128xf32>
    %34 = arith.mulf %29, %33 : vector<96x128xf32>
    %cst_12 = arith.constant 0.000000e+00 : f32
    %35 = vector.broadcast %cst_12 : f32 to vector<96x128xf32>
    %36 = arith.minimumf %34, %35 : vector<96x128xf32>
    %37 = math.absf %34 : vector<96x128xf32>
    %cst_13 = arith.constant 0.000000e+00 : f32
    %38 = vector.broadcast %cst_13 : f32 to vector<96x128xf32>
    %39 = arith.subf %38, %37 : vector<96x128xf32>
    %40 = math.exp %39 : vector<96x128xf32>
    %41 = math.log1p %40 : vector<96x128xf32>
    %42 = arith.subf %36, %41 : vector<96x128xf32>
    %cst_14 = arith.constant 2.000000e+00 : f32
    %43 = vector.broadcast %cst_14 : f32 to vector<96x128xf32>
    %44 = arith.mulf %42, %43 : vector<96x128xf32>
    %45 = math.exp %44 : vector<96x128xf32>
    %46 = arith.mulf %45, %27 : vector<96x128xf32>
    %c96_i32_15 = arith.constant 96 : i32
    %47 = arith.muli %c0_i32_4, %c96_i32_15 : i32
    %48 = vector.broadcast %47 : i32 to vector<96x128xi32>
    %49 = arith.addi %9, %48 : vector<96x128xi32>
    %50 = vector.broadcast %8 : i32 to vector<96x128xi32>
    %51 = arith.cmpi slt, %49, %50 : vector<96x128xi32>
    %cst_16 = arith.constant 0.000000e+00 : f32
    %52 = vector.broadcast %cst_16 : f32 to vector<96x128xf32>
    %53 = arith.select %51, %46, %52 : vector<96x128xi1>, vector<96x128xf32>
    %54 = vector.shape_cast %53 : vector<96x128xf32> to vector<12x8x128xf32>
    %cst_17 = arith.constant dense<0.000000e+00> : vector<8x128xf32>
    %55 = vector.multi_reduction <add>, %54, %cst_17 [0] : vector<12x8x128xf32> to vector<8x128xf32>
    %56 = arith.addf %10, %55 : vector<8x128xf32>
    %c1_i32_18 = arith.constant 1 : i32
    %c0_19 = arith.constant 0 : index
    %c0_20 = arith.constant 0 : index
    %c0_21 = arith.constant 0 : index
    %57 = vector.load %arg4[%c0_19, %c0_20, %c0_21] : memref<1x8x128xf32, #tpu.memory_space<vmem>>, vector<1x8x128xf32>
    %58 = vector.shape_cast %56 : vector<8x128xf32> to vector<1x8x128xf32>
    %59 = arith.addf %57, %58 : vector<1x8x128xf32>
    %c0_22 = arith.constant 0 : index
    %c0_23 = arith.constant 0 : index
    %c0_24 = arith.constant 0 : index
    %60 = vector.load %arg4[%c0_22, %c0_23, %c0_24] : memref<1x8x128xf32, #tpu.memory_space<vmem>>, vector<1x8x128xf32>
    tpu.vector_store %arg4[%c0_22, %c0_23, %c0_24], %59 {strides = array<i32>} : memref<1x8x128xf32, #tpu.memory_space<vmem>>, vector<1x8x128xf32>,
    return
  }
  func.func @transform_0(%arg0: i32, %arg1: i32) -> (i32, i32) {
    %c1_i32 = arith.constant 1 : i32
    %0 = arith.muli %arg0, %c1_i32 : i32
    %1 = arith.addi %0, %arg1 : i32
    %c0_i32 = arith.constant 0 : i32
    %2 = arith.minsi %1, %c0_i32 : i32
    %c0_i32_0 = arith.constant 0 : i32
    %c0_i32_1 = arith.constant 0 : i32
    return %2, %c0_i32_0 : i32, i32
  }
  func.func @transform_1(%arg0: i32, %arg1: i32) -> (i32, i32) {
    %c1_i32 = arith.constant 1 : i32
    %0 = arith.muli %arg0, %c1_i32 : i32
    %1 = arith.addi %0, %arg1 : i32
    %c0_i32 = arith.constant 0 : i32
    %2 = arith.minsi %1, %c0_i32 : i32
    %c0_i32_0 = arith.constant 0 : i32
    %c0_i32_1 = arith.constant 0 : i32
    return %2, %c0_i32_0 : i32, i32
  }
  func.func @transform_2(%arg0: i32, %arg1: i32) -> (i32, i32, i32) {
    %c0_i32 = arith.constant 0 : i32
    %c0_i32_0 = arith.constant 0 : i32
    %c0_i32_1 = arith.constant 0 : i32
    return %arg0, %c0_i32, %c0_i32_0 : i32, i32, i32
  }
}

</mosaic_0001>

<llo_original>
// kernel: tpu_custom_call.1
$region0: #{tpu_custom_call.1}
  #allocation0 [shape = 'u32[]', space=smem, size = 0x4, offset = 0x4, fixed_abs, tag = 'smem constant byte address 0x4 - core index']
  #allocation1 [shape = 'u32[144,128]{1,0:T(1,128)}', space=vmem, size = 0x12000, scoped, tag = 'internal scratch']
  %s0 = inlined_call_operand.hbm [shape: f32[96,128], index: 0, kind: input, shape index: {}]
  %s1 = inlined_call_operand.hbm [shape: f32[96,128], index: 1, kind: input, shape index: {}]
  %s2 = inlined_call_operand.hbm [shape: f32[1,8,128], index: 2, kind: output, shape index: {}]
  %s3 = sld [smem:[#allocation0]]
  $region30: #{tpu_custom_call.1} parent=0
    _
  %s5 = ssub.s32 1, %s3
  %s6 = scalar_select 0, %s5, %s3
  $region1: #{tpu_custom_call.1} parent=0
    #allocation2 [shape = 'u8[49152]{0}', space=vmem, size = 0xc000, scoped, tag = 'input window, operand 0, single buffered']
    #allocation3 [shape = 's32[1]{0}', space=sflag, size = 0x4, scoped, tag = 'scoped memory for tpu_custom_call.1']
    #allocation4 [shape = 's32[1]{0}', space=sflag, size = 0x4, scoped, tag = 'scoped memory for tpu_custom_call.1']
    #allocation5 [shape = 'u8[49152]{0}', space=vmem, size = 0xc000, scoped, tag = 'input window, operand 1, single buffered']
    #allocation6 [shape = 's32[1]{0}', space=sflag, size = 0x4, scoped, tag = 'scoped memory for tpu_custom_call.1']
    #allocation7 [shape = 'u8[4096]{0}', space=vmem, size = 0x1000, scoped, tag = 'output window, operand 0, single buffered']
    %7 = vsyncpa [#allocation3], 0
    %8 = vsyncpa [#allocation6], 0
    %9 = vsyncpa [#allocation4], 0
    // Predicated region
    $region2: #{tpu_custom_call.1} parent=1 // pred_check
      _
    $region3: #{tpu_custom_call.1} parent=1 // pred_check_branch
      %11 = sbr.rel (0) target = $region5
    $region4: #{tpu_custom_call.1} parent=1 // pred_region
      %s12 = sadd.s32 0, 0
      %p13 = scmp.lt.s32.totalorder %s12, 0
      %s14 = scalar_select %p13, %s12, 0
      %s15 = smul.u32 12, %s14
      %s17 = ssub.s32 1536, 1536
      %18 = vsyncadd [#allocation3], %s17
      %s19 = smul.addr %s15, 128
      %s20 = scalar_lea.hbm %s0, %s19
      %s21 = sshll.u32 [#allocation2], 4
      %s22 = int_to_ptr.vmem [resolvable:$true] %s21
      %27 = dma.hbm_to_vmem [thread:$0]  %s20, 1536, %s22, [#allocation3], 128, 128, 8
    $region5: #{tpu_custom_call.1} parent=1 // pred_fallthru
      _
    // Predicated region
    $region6: #{tpu_custom_call.1} parent=1 // pred_check
      _
    $region7: #{tpu_custom_call.1} parent=1 // pred_check_branch
      %29 = sbr.rel (0) target = $region9
    $region8: #{tpu_custom_call.1} parent=1 // pred_region
      %s30 = sadd.s32 0, 0
      %p31 = scmp.lt.s32.totalorder %s30, 0
      %s32 = scalar_select %p31, %s30, 0
      %s33 = smul.u32 12, %s32
      %s35 = ssub.s32 1536, 1536
      %36 = vsyncadd [#allocation6], %s35
      %s37 = smul.addr %s33, 128
      %s38 = scalar_lea.hbm %s1, %s37
      %s39 = sshll.u32 [#allocation5], 4
      %s40 = int_to_ptr.vmem [resolvable:$true] %s39
      %45 = dma.hbm_to_vmem [thread:$0]  %s38, 1536, %s40, [#allocation6], 128, 128, 8
    $region9: #{tpu_custom_call.1} parent=1 // pred_fallthru
      _
    // Predicated region
    $region10: #{tpu_custom_call.1} parent=1 // pred_check
      _
    $region11: #{tpu_custom_call.1} parent=1 // pred_check_branch
      %47 = sbr.rel (0) target = $region13
    $region12: #{tpu_custom_call.1} parent=1 // pred_region
      %48 = dma.done [#allocation3], 1536
    $region13: #{tpu_custom_call.1} parent=1 // pred_fallthru
      _
    // Predicated region
    $region14: #{tpu_custom_call.1} parent=1 // pred_check
      _
    $region15: #{tpu_custom_call.1} parent=1 // pred_check_branch
      %50 = sbr.rel (0) target = $region17
    $region16: #{tpu_custom_call.1} parent=1 // pred_region
      %51 = dma.done [#allocation6], 1536
    $region17: #{tpu_custom_call.1} parent=1 // pred_fallthru
      _
    %s52 = sadd.s32 0, 0
    %p53 = scmp.lt.s32.totalorder %s52, 0
    %s54 = scalar_select %p53, %s52, 0
    %s55 = smul.u32 12, %s54
    %s56 = sadd.s32 0, 0
    %p57 = scmp.lt.s32.totalorder %s56, 0
    %s58 = scalar_select %p57, %s56, 0
    %s59 = smul.u32 12, %s58
    %p60 = scmp.eq.s32.totalorder 0, 0
    // Predicated region
    $region18: #{tpu_custom_call.1} parent=1 // pred_check
      %p61 = pneg %p60
    $region19: #{tpu_custom_call.1} parent=1 // pred_check_branch
      %63 = sbr.rel (%p61) target = $region21
    $region20: #{tpu_custom_call.1} parent=1 // pred_region
      %64 = vst [vmem:[#allocation7] sm:$0xff] 0.0
    $region21: #{tpu_custom_call.1} parent=1 // pred_fallthru
      _
    %s65 = sadd.s32 0, 0
    %s66 = smul.u32 %s65, 96
    %s67 = ssub.s32 96, %s66
    %p68 = scmp.gt.s32.totalorder %s67, 0
    %s69 = scalar_select %p68, %s67, 0
    %p70 = scmp.lt.s32.totalorder %s69, 96
    %s71 = scalar_select %p70, %s69, 96
    %v72 = vlaneseq
    %v73 = vshrl.u32 %v72, 7
    %v74 = vadd.s32 %v73, 8
    %v75 = vadd.s32 %v73, 16
    %v76 = vadd.s32 %v73, 24
    %v77 = vadd.s32 %v73, 32
    %v78 = vadd.s32 %v73, 40
    %v79 = vadd.s32 %v73, 48
    %v80 = vadd.s32 %v73, 56
    %v81 = vadd.s32 %v73, 64
    %v82 = vadd.s32 %v73, 72
    %v83 = vadd.s32 %v73, 80
    %v84 = vadd.s32 %v73, 88
    %v85 = vld [vmem:[#allocation2] sm:$0xff]
    %v86 = vld [vmem:[#allocation2 + $0x8] sm:$0xff]
    %v87 = vld [vmem:[#allocation2 + $0x10] sm:$0xff]
    %v88 = vld [vmem:[#allocation2 + $0x18] sm:$0xff]
    %v89 = vld [vmem:[#allocation2 + $0x20] sm:$0xff]
    %v90 = vld [vmem:[#allocation2 + $0x28] sm:$0xff]
    %v91 = vld [vmem:[#allocation2 + $0x30] sm:$0xff]
    %v92 = vld [vmem:[#allocation2 + $0x38] sm:$0xff]
    %v93 = vld [vmem:[#allocation2 + $0x40] sm:$0xff]
    %v94 = vld [vmem:[#allocation2 + $0x48] sm:$0xff]
    %v95 = vld [vmem:[#allocation2 + $0x50] sm:$0xff]
    %v96 = vld [vmem:[#allocation2 + $0x58] sm:$0xff]
    %v97 = vld [vmem:[#allocation5] sm:$0xff]
    %v98 = vld [vmem:[#allocation5 + $0x8] sm:$0xff]
    %v99 = vld [vmem:[#allocation5 + $0x10] sm:$0xff]
    %v100 = vld [vmem:[#allocation5 + $0x18] sm:$0xff]
    %v101 = vld [vmem:[#allocation5 + $0x20] sm:$0xff]
    %v102 = vld [vmem:[#allocation5 + $0x28] sm:$0xff]
    %v103 = vld [vmem:[#allocation5 + $0x30] sm:$0xff]
    %v104 = vld [vmem:[#allocation5 + $0x38] sm:$0xff]
    %v105 = vld [vmem:[#allocation5 + $0x40] sm:$0xff]
    %v106 = vld [vmem:[#allocation5 + $0x48] sm:$0xff]
    %v107 = vld [vmem:[#allocation5 + $0x50] sm:$0xff]
    %v108 = vld [vmem:[#allocation5 + $0x58] sm:$0xff]
    %v109 = vmul.f32 %v85, %v97
    %v110 = vmul.f32 %v86, %v98
    %v111 = vmul.f32 %v87, %v99
    %v112 = vmul.f32 %v88, %v100
    %v113 = vmul.f32 %v89, %v101
    %v114 = vmul.f32 %v90, %v102
    %v115 = vmul.f32 %v91, %v103
    %v116 = vmul.f32 %v92, %v104
    %v117 = vmul.f32 %v93, %v105
    %v118 = vmul.f32 %v94, %v106
    %v119 = vmul.f32 %v95, %v107
    %v120 = vmul.f32 %v96, %v108
    %v121 = vsub.f32 %v85, %v109
    %v122 = vsub.f32 %v86, %v110
    %v123 = vsub.f32 %v87, %v111
    %v124 = vsub.f32 %v88, %v112
    %v125 = vsub.f32 %v89, %v113
    %v126 = vsub.f32 %v90, %v114
    %v127 = vsub.f32 %v91, %v115
    %v128 = vsub.f32 %v92, %v116
    %v129 = vsub.f32 %v93, %v117
    %v130 = vsub.f32 %v94, %v118
    %v131 = vsub.f32 %v95, %v119
    %v132 = vsub.f32 %v96, %v120
    %v133 = vmin.f32 %v85, 0.0
    %v134 = vmin.f32 %v86, 0.0
    %v135 = vmin.f32 %v87, 0.0
    %v136 = vmin.f32 %v88, 0.0
    %v137 = vmin.f32 %v89, 0.0
    %v138 = vmin.f32 %v90, 0.0
    %v139 = vmin.f32 %v91, 0.0
    %v140 = vmin.f32 %v92, 0.0
    %v141 = vmin.f32 %v93, 0.0
    %v142 = vmin.f32 %v94, 0.0
    %v143 = vmin.f32 %v95, 0.0
    %v144 = vmin.f32 %v96, 0.0
    %v145 = vand.u32 2147483647, %v85
    %v146 = vand.u32 2147483647, %v86
    %v147 = vand.u32 2147483647, %v87
    %v148 = vand.u32 2147483647, %v88
    %v149 = vand.u32 2147483647, %v89
    %v150 = vand.u32 2147483647, %v90
    %v151 = vand.u32 2147483647, %v91
    %v152 = vand.u32 2147483647, %v92
    %v153 = vand.u32 2147483647, %v93
    %v154 = vand.u32 2147483647, %v94
    %v155 = vand.u32 2147483647, %v95
    %v156 = vand.u32 2147483647, %v96
    %v157 = vsub.f32 0.0, %v145
    %v158 = vsub.f32 0.0, %v146
    %v159 = vsub.f32 0.0, %v147
    %v160 = vsub.f32 0.0, %v148
    %v161 = vsub.f32 0.0, %v149
    %v162 = vsub.f32 0.0, %v150
    %v163 = vsub.f32 0.0, %v151
    %v164 = vsub.f32 0.0, %v152
    %v165 = vsub.f32 0.0, %v153
    %v166 = vsub.f32 0.0, %v154
    %v167 = vsub.f32 0.0, %v155
    %v168 = vsub.f32 0.0, %v156
    %v169 = vmul.f32 %v157, 1.442695
    %v170 = vpow.pop %v169
    %v171 = vmul.f32 %v158, 1.442695
    %v172 = vpow.pop %v171
    %v173 = vmul.f32 %v159, 1.442695
    %v174 = vpow.pop %v173
    %v175 = vmul.f32 %v160, 1.442695
    %v176 = vpow.pop %v175
    %v177 = vmul.f32 %v161, 1.442695
    %v178 = vpow.pop %v177
    %v179 = vmul.f32 %v162, 1.442695
    %v180 = vpow.pop %v179
    %v181 = vmul.f32 %v163, 1.442695
    %v182 = vpow.pop %v181
    %v183 = vmul.f32 %v164, 1.442695
    %v184 = vpow.pop %v183
    %v185 = vmul.f32 %v165, 1.442695
    %v186 = vpow.pop %v185
    %v187 = vmul.f32 %v166, 1.442695
    %v188 = vpow.pop %v187
    %v189 = vmul.f32 %v167, 1.442695
    %v190 = vpow.pop %v189
    %v191 = vmul.f32 %v168, 1.442695
    %v192 = vpow.pop %v191
    %v193 = vadd.f32 %v170, 1.0
    %v194 = vlog2.pop %v193
    %v195 = vmul.f32 %v194, 0.6931472
    %v196 = vmul.f32 -0.5, %v170
    %v197 = vadd.f32 %v196, 1.0
    %v198 = vmul.f32 %v197, %v170
    %v199 = vand.u32 2147483647, %v170
    %vm200 = vcmp.lt.f32.partialorder %v199, 0.0004427343
    %v201 = vsel %vm200, %v198, %v195
    %v202 = vadd.f32 %v172, 1.0
    %v203 = vlog2.pop %v202
    %v204 = vmul.f32 %v203, 0.6931472
    %v205 = vmul.f32 -0.5, %v172
    %v206 = vadd.f32 %v205, 1.0
    %v207 = vmul.f32 %v206, %v172
    %v208 = vand.u32 2147483647, %v172
    %vm209 = vcmp.lt.f32.partialorder %v208, 0.0004427343
    %v210 = vsel %vm209, %v207, %v204
    %v211 = vadd.f32 %v174, 1.0
    %v212 = vlog2.pop %v211
    %v213 = vmul.f32 %v212, 0.6931472
    %v214 = vmul.f32 -0.5, %v174
    %v215 = vadd.f32 %v214, 1.0
    %v216 = vmul.f32 %v215, %v174
    %v217 = vand.u32 2147483647, %v174
    %vm218 = vcmp.lt.f32.partialorder %v217, 0.0004427343
    %v219 = vsel %vm218, %v216, %v213
    %v220 = vadd.f32 %v176, 1.0
    %v221 = vlog2.pop %v220
    %v222 = vmul.f32 %v221, 0.6931472
    %v223 = vmul.f32 -0.5, %v176
    %v224 = vadd.f32 %v223, 1.0
    %v225 = vmul.f32 %v224, %v176
    %v226 = vand.u32 2147483647, %v176
    %vm227 = vcmp.lt.f32.partialorder %v226, 0.0004427343
    %v228 = vsel %vm227, %v225, %v222
    %v229 = vadd.f32 %v178, 1.0
    %v230 = vlog2.pop %v229
    %v231 = vmul.f32 %v230, 0.6931472
    %v232 = vmul.f32 -0.5, %v178
    %v233 = vadd.f32 %v232, 1.0
    %v234 = vmul.f32 %v233, %v178
    %v235 = vand.u32 2147483647, %v178
    %vm236 = vcmp.lt.f32.partialorder %v235, 0.0004427343
    %v237 = vsel %vm236, %v234, %v231
    %v238 = vadd.f32 %v180, 1.0
    %v239 = vlog2.pop %v238
    %v240 = vmul.f32 %v239, 0.6931472
    %v241 = vmul.f32 -0.5, %v180
    %v242 = vadd.f32 %v241, 1.0
    %v243 = vmul.f32 %v242, %v180
    %v244 = vand.u32 2147483647, %v180
    %vm245 = vcmp.lt.f32.partialorder %v244, 0.0004427343
    %v246 = vsel %vm245, %v243, %v240
    %v247 = vadd.f32 %v182, 1.0
    %v248 = vlog2.pop %v247
    %v249 = vmul.f32 %v248, 0.6931472
    %v250 = vmul.f32 -0.5, %v182
    %v251 = vadd.f32 %v250, 1.0
    %v252 = vmul.f32 %v251, %v182
    %v253 = vand.u32 2147483647, %v182
    %vm254 = vcmp.lt.f32.partialorder %v253, 0.0004427343
    %v255 = vsel %vm254, %v252, %v249
    %v256 = vadd.f32 %v184, 1.0
    %v257 = vlog2.pop %v256
    %v258 = vmul.f32 %v257, 0.6931472
    %v259 = vmul.f32 -0.5, %v184
    %v260 = vadd.f32 %v259, 1.0
    %v261 = vmul.f32 %v260, %v184
    %v262 = vand.u32 2147483647, %v184
    %vm263 = vcmp.lt.f32.partialorder %v262, 0.0004427343
    %v264 = vsel %vm263, %v261, %v258
    %v265 = vadd.f32 %v186, 1.0
    %v266 = vlog2.pop %v265
    %v267 = vmul.f32 %v266, 0.6931472
    %v268 = vmul.f32 -0.5, %v186
    %v269 = vadd.f32 %v268, 1.0
    %v270 = vmul.f32 %v269, %v186
    %v271 = vand.u32 2147483647, %v186
    %vm272 = vcmp.lt.f32.partialorder %v271, 0.0004427343
    %v273 = vsel %vm272, %v270, %v267
    %v274 = vadd.f32 %v188, 1.0
    %v275 = vlog2.pop %v274
    %v276 = vmul.f32 %v275, 0.6931472
    %v277 = vmul.f32 -0.5, %v188
    %v278 = vadd.f32 %v277, 1.0
    %v279 = vmul.f32 %v278, %v188
    %v280 = vand.u32 2147483647, %v188
    %vm281 = vcmp.lt.f32.partialorder %v280, 0.0004427343
    %v282 = vsel %vm281, %v279, %v276
    %v283 = vadd.f32 %v190, 1.0
    %v284 = vlog2.pop %v283
    %v285 = vmul.f32 %v284, 0.6931472
    %v286 = vmul.f32 -0.5, %v190
    %v287 = vadd.f32 %v286, 1.0
    %v288 = vmul.f32 %v287, %v190
    %v289 = vand.u32 2147483647, %v190
    %vm290 = vcmp.lt.f32.partialorder %v289, 0.0004427343
    %v291 = vsel %vm290, %v288, %v285
    %v292 = vadd.f32 %v192, 1.0
    %v293 = vlog2.pop %v292
    %v294 = vmul.f32 %v293, 0.6931472
    %v295 = vmul.f32 -0.5, %v192
    %v296 = vadd.f32 %v295, 1.0
    %v297 = vmul.f32 %v296, %v192
    %v298 = vand.u32 2147483647, %v192
    %vm299 = vcmp.lt.f32.partialorder %v298, 0.0004427343
    %v300 = vsel %vm299, %v297, %v294
    %v301 = vsub.f32 %v133, %v201
    %v302 = vsub.f32 %v134, %v210
    %v303 = vsub.f32 %v135, %v219
    %v304 = vsub.f32 %v136, %v228
    %v305 = vsub.f32 %v137, %v237
    %v306 = vsub.f32 %v138, %v246
    %v307 = vsub.f32 %v139, %v255
    %v308 = vsub.f32 %v140, %v264
    %v309 = vsub.f32 %v141, %v273
    %v310 = vsub.f32 %v142, %v282
    %v311 = vsub.f32 %v143, %v291
    %v312 = vsub.f32 %v144, %v300
    %v313 = vsub.f32 %v121, %v301
    %v314 = vsub.f32 %v122, %v302
    %v315 = vsub.f32 %v123, %v303
    %v316 = vsub.f32 %v124, %v304
    %v317 = vsub.f32 %v125, %v305
    %v318 = vsub.f32 %v126, %v306
    %v319 = vsub.f32 %v127, %v307
    %v320 = vsub.f32 %v128, %v308
    %v321 = vsub.f32 %v129, %v309
    %v322 = vsub.f32 %v130, %v310
    %v323 = vsub.f32 %v131, %v311
    %v324 = vsub.f32 %v132, %v312
    %v325 = vsub.f32 0.0, %v85
    %v326 = vsub.f32 0.0, %v86
    %v327 = vsub.f32 0.0, %v87
    %v328 = vsub.f32 0.0, %v88
    %v329 = vsub.f32 0.0, %v89
    %v330 = vsub.f32 0.0, %v90
    %v331 = vsub.f32 0.0, %v91
    %v332 = vsub.f32 0.0, %v92
    %v333 = vsub.f32 0.0, %v93
    %v334 = vsub.f32 0.0, %v94
    %v335 = vsub.f32 0.0, %v95
    %v336 = vsub.f32 0.0, %v96
    %v337 = vmul.f32 %v97, 2.0
    %v338 = vmul.f32 %v98, 2.0
    %v339 = vmul.f32 %v99, 2.0
    %v340 = vmul.f32 %v100, 2.0
    %v341 = vmul.f32 %v101, 2.0
    %v342 = vmul.f32 %v102, 2.0
    %v343 = vmul.f32 %v103, 2.0
    %v344 = vmul.f32 %v104, 2.0
    %v345 = vmul.f32 %v105, 2.0
    %v346 = vmul.f32 %v106, 2.0
    %v347 = vmul.f32 %v107, 2.0
    %v348 = vmul.f32 %v108, 2.0
    %v349 = vsub.f32 %v337, 1.0
    %v350 = vsub.f32 %v338, 1.0
    %v351 = vsub.f32 %v339, 1.0
    %v352 = vsub.f32 %v340, 1.0
    %v353 = vsub.f32 %v341, 1.0
    %v354 = vsub.f32 %v342, 1.0
    %v355 = vsub.f32 %v343, 1.0
    %v356 = vsub.f32 %v344, 1.0
    %v357 = vsub.f32 %v345, 1.0
    %v358 = vsub.f32 %v346, 1.0
    %v359 = vsub.f32 %v347, 1.0
    %v360 = vsub.f32 %v348, 1.0
    %v361 = vmul.f32 %v325, %v349
    %v362 = vmul.f32 %v326, %v350
    %v363 = vmul.f32 %v327, %v351
    %v364 = vmul.f32 %v328, %v352
    %v365 = vmul.f32 %v329, %v353
    %v366 = vmul.f32 %v330, %v354
    %v367 = vmul.f32 %v331, %v355
    %v368 = vmul.f32 %v332, %v356
    %v369 = vmul.f32 %v333, %v357
    %v370 = vmul.f32 %v334, %v358
    %v371 = vmul.f32 %v335, %v359
    %v372 = vmul.f32 %v336, %v360
    %v373 = vmin.f32 %v361, 0.0
    %v374 = vmin.f32 %v362, 0.0
    %v375 = vmin.f32 %v363, 0.0
    %v376 = vmin.f32 %v364, 0.0
    %v377 = vmin.f32 %v365, 0.0
    %v378 = vmin.f32 %v366, 0.0
    %v379 = vmin.f32 %v367, 0.0
    %v380 = vmin.f32 %v368, 0.0
    %v381 = vmin.f32 %v369, 0.0
    %v382 = vmin.f32 %v370, 0.0
    %v383 = vmin.f32 %v371, 0.0
    %v384 = vmin.f32 %v372, 0.0
    %v385 = vand.u32 2147483647, %v361
    %v386 = vand.u32 2147483647, %v362
    %v387 = vand.u32 2147483647, %v363
    %v388 = vand.u32 2147483647, %v364
    %v389 = vand.u32 2147483647, %v365
    %v390 = vand.u32 2147483647, %v366
    %v391 = vand.u32 2147483647, %v367
    %v392 = vand.u32 2147483647, %v368
    %v393 = vand.u32 2147483647, %v369
    %v394 = vand.u32 2147483647, %v370
    %v395 = vand.u32 2147483647, %v371
    %v396 = vand.u32 2147483647, %v372
    %v397 = vsub.f32 0.0, %v385
    %v398 = vsub.f32 0.0, %v386
    %v399 = vsub.f32 0.0, %v387
    %v400 = vsub.f32 0.0, %v388
    %v401 = vsub.f32 0.0, %v389
    %v402 = vsub.f32 0.0, %v390
    %v403 = vsub.f32 0.0, %v391
    %v404 = vsub.f32 0.0, %v392
    %v405 = vsub.f32 0.0, %v393
    %v406 = vsub.f32 0.0, %v394
    %v407 = vsub.f32 0.0, %v395
    %v408 = vsub.f32 0.0, %v396
    %v409 = vmul.f32 %v397, 1.442695
    %v410 = vpow.pop %v409
    %v411 = vmul.f32 %v398, 1.442695
    %v412 = vpow.pop %v411
    %v413 = vmul.f32 %v399, 1.442695
    %v414 = vpow.pop %v413
    %v415 = vmul.f32 %v400, 1.442695
    %v416 = vpow.pop %v415
    %v417 = vmul.f32 %v401, 1.442695
    %v418 = vpow.pop %v417
    %v419 = vmul.f32 %v402, 1.442695
    %v420 = vpow.pop %v419
    %v421 = vmul.f32 %v403, 1.442695
    %v422 = vpow.pop %v421
    %v423 = vmul.f32 %v404, 1.442695
    %v424 = vpow.pop %v423
    %v425 = vmul.f32 %v405, 1.442695
    %v426 = vpow.pop %v425
    %v427 = vmul.f32 %v406, 1.442695
    %v428 = vpow.pop %v427
    %v429 = vmul.f32 %v407, 1.442695
    %v430 = vpow.pop %v429
    %v431 = vmul.f32 %v408, 1.442695
    %v432 = vpow.pop %v431
    %v433 = vadd.f32 %v410, 1.0
    %v434 = vlog2.pop %v433
    %v435 = vmul.f32 %v434, 0.6931472
    %v436 = vmul.f32 -0.5, %v410
    %v437 = vadd.f32 %v436, 1.0
    %v438 = vmul.f32 %v437, %v410
    %v439 = vand.u32 2147483647, %v410
    %vm440 = vcmp.lt.f32.partialorder %v439, 0.0004427343
    %v441 = vsel %vm440, %v438, %v435
    %v442 = vadd.f32 %v412, 1.0
    %v443 = vlog2.pop %v442
    %v444 = vmul.f32 %v443, 0.6931472
    %v445 = vmul.f32 -0.5, %v412
    %v446 = vadd.f32 %v445, 1.0
    %v447 = vmul.f32 %v446, %v412
    %v448 = vand.u32 2147483647, %v412
    %vm449 = vcmp.lt.f32.partialorder %v448, 0.0004427343
    %v450 = vsel %vm449, %v447, %v444
    %v451 = vadd.f32 %v414, 1.0
    %v452 = vlog2.pop %v451
    %v453 = vmul.f32 %v452, 0.6931472
    %v454 = vmul.f32 -0.5, %v414
    %v455 = vadd.f32 %v454, 1.0
    %v456 = vmul.f32 %v455, %v414
    %v457 = vand.u32 2147483647, %v414
    %vm458 = vcmp.lt.f32.partialorder %v457, 0.0004427343
    %v459 = vsel %vm458, %v456, %v453
    %v460 = vadd.f32 %v416, 1.0
    %v461 = vlog2.pop %v460
    %v462 = vmul.f32 %v461, 0.6931472
    %v463 = vmul.f32 -0.5, %v416
    %v464 = vadd.f32 %v463, 1.0
    %v465 = vmul.f32 %v464, %v416
    %v466 = vand.u32 2147483647, %v416
    %vm467 = vcmp.lt.f32.partialorder %v466, 0.0004427343
    %v468 = vsel %vm467, %v465, %v462
    %v469 = vadd.f32 %v418, 1.0
    %v470 = vlog2.pop %v469
    %v471 = vmul.f32 %v470, 0.6931472
    %v472 = vmul.f32 -0.5, %v418
    %v473 = vadd.f32 %v472, 1.0
    %v474 = vmul.f32 %v473, %v418
    %v475 = vand.u32 2147483647, %v418
    %vm476 = vcmp.lt.f32.partialorder %v475, 0.0004427343
    %v477 = vsel %vm476, %v474, %v471
    %v478 = vadd.f32 %v420, 1.0
    %v479 = vlog2.pop %v478
    %v480 = vmul.f32 %v479, 0.6931472
    %v481 = vmul.f32 -0.5, %v420
    %v482 = vadd.f32 %v481, 1.0
    %v483 = vmul.f32 %v482, %v420
    %v484 = vand.u32 2147483647, %v420
    %vm485 = vcmp.lt.f32.partialorder %v484, 0.0004427343
    %v486 = vsel %vm485, %v483, %v480
    %v487 = vadd.f32 %v422, 1.0
    %v488 = vlog2.pop %v487
    %v489 = vmul.f32 %v488, 0.6931472
    %v490 = vmul.f32 -0.5, %v422
    %v491 = vadd.f32 %v490, 1.0
    %v492 = vmul.f32 %v491, %v422
    %v493 = vand.u32 2147483647, %v422
    %vm494 = vcmp.lt.f32.partialorder %v493, 0.0004427343
    %v495 = vsel %vm494, %v492, %v489
    %v496 = vadd.f32 %v424, 1.0
    %v497 = vlog2.pop %v496
    %v498 = vmul.f32 %v497, 0.6931472
    %v499 = vmul.f32 -0.5, %v424
    %v500 = vadd.f32 %v499, 1.0
    %v501 = vmul.f32 %v500, %v424
    %v502 = vand.u32 2147483647, %v424
    %vm503 = vcmp.lt.f32.partialorder %v502, 0.0004427343
    %v504 = vsel %vm503, %v501, %v498
    %v505 = vadd.f32 %v426, 1.0
    %v506 = vlog2.pop %v505
    %v507 = vmul.f32 %v506, 0.6931472
    %v508 = vmul.f32 -0.5, %v426
    %v509 = vadd.f32 %v508, 1.0
    %v510 = vmul.f32 %v509, %v426
    %v511 = vand.u32 2147483647, %v426
    %vm512 = vcmp.lt.f32.partialorder %v511, 0.0004427343
    %v513 = vsel %vm512, %v510, %v507
    %v514 = vadd.f32 %v428, 1.0
    %v515 = vlog2.pop %v514
    %v516 = vmul.f32 %v515, 0.6931472
    %v517 = vmul.f32 -0.5, %v428
    %v518 = vadd.f32 %v517, 1.0
    %v519 = vmul.f32 %v518, %v428
    %v520 = vand.u32 2147483647, %v428
    %vm521 = vcmp.lt.f32.partialorder %v520, 0.0004427343
    %v522 = vsel %vm521, %v519, %v516
    %v523 = vadd.f32 %v430, 1.0
    %v524 = vlog2.pop %v523
    %v525 = vmul.f32 %v524, 0.6931472
    %v526 = vmul.f32 -0.5, %v430
    %v527 = vadd.f32 %v526, 1.0
    %v528 = vmul.f32 %v527, %v430
    %v529 = vand.u32 2147483647, %v430
    %vm530 = vcmp.lt.f32.partialorder %v529, 0.0004427343
    %v531 = vsel %vm530, %v528, %v525
    %v532 = vadd.f32 %v432, 1.0
    %v533 = vlog2.pop %v532
    %v534 = vmul.f32 %v533, 0.6931472
    %v535 = vmul.f32 -0.5, %v432
    %v536 = vadd.f32 %v535, 1.0
    %v537 = vmul.f32 %v536, %v432
    %v538 = vand.u32 2147483647, %v432
    %vm539 = vcmp.lt.f32.partialorder %v538, 0.0004427343
    %v540 = vsel %vm539, %v537, %v534
    %v541 = vsub.f32 %v373, %v441
    %v542 = vsub.f32 %v374, %v450
    %v543 = vsub.f32 %v375, %v459
    %v544 = vsub.f32 %v376, %v468
    %v545 = vsub.f32 %v377, %v477
    %v546 = vsub.f32 %v378, %v486
    %v547 = vsub.f32 %v379, %v495
    %v548 = vsub.f32 %v380, %v504
    %v549 = vsub.f32 %v381, %v513
    %v550 = vsub.f32 %v382, %v522
    %v551 = vsub.f32 %v383, %v531
    %v552 = vsub.f32 %v384, %v540
    %v553 = vmul.f32 %v541, 2.0
    %v554 = vmul.f32 %v542, 2.0
    %v555 = vmul.f32 %v543, 2.0
    %v556 = vmul.f32 %v544, 2.0
    %v557 = vmul.f32 %v545, 2.0
    %v558 = vmul.f32 %v546, 2.0
    %v559 = vmul.f32 %v547, 2.0
    %v560 = vmul.f32 %v548, 2.0
    %v561 = vmul.f32 %v549, 2.0
    %v562 = vmul.f32 %v550, 2.0
    %v563 = vmul.f32 %v551, 2.0
    %v564 = vmul.f32 %v552, 2.0
    %v565 = vmul.f32 %v553, 1.442695
    %v566 = vpow.pop %v565
    %v567 = vmul.f32 %v554, 1.442695
    %v568 = vpow.pop %v567
    %v569 = vmul.f32 %v555, 1.442695
    %v570 = vpow.pop %v569
    %v571 = vmul.f32 %v556, 1.442695
    %v572 = vpow.pop %v571
    %v573 = vmul.f32 %v557, 1.442695
    %v574 = vpow.pop %v573
    %v575 = vmul.f32 %v558, 1.442695
    %v576 = vpow.pop %v575
    %v577 = vmul.f32 %v559, 1.442695
    %v578 = vpow.pop %v577
    %v579 = vmul.f32 %v560, 1.442695
    %v580 = vpow.pop %v579
    %v581 = vmul.f32 %v561, 1.442695
    %v582 = vpow.pop %v581
    %v583 = vmul.f32 %v562, 1.442695
    %v584 = vpow.pop %v583
    %v585 = vmul.f32 %v563, 1.442695
    %v586 = vpow.pop %v585
    %v587 = vmul.f32 %v564, 1.442695
    %v588 = vpow.pop %v587
    %v589 = vmul.f32 %v566, %v313
    %v590 = vmul.f32 %v568, %v314
    %v591 = vmul.f32 %v570, %v315
    %v592 = vmul.f32 %v572, %v316
    %v593 = vmul.f32 %v574, %v317
    %v594 = vmul.f32 %v576, %v318
    %v595 = vmul.f32 %v578, %v319
    %v596 = vmul.f32 %v580, %v320
    %v597 = vmul.f32 %v582, %v321
    %v598 = vmul.f32 %v584, %v322
    %v599 = vmul.f32 %v586, %v323
    %v600 = vmul.f32 %v588, %v324
    %v601 = vstv %s71
    %vm602 = vcmp.lt.s32.totalorder %v73, %v601
    %vm603 = vcmp.lt.s32.totalorder %v74, %v601
    %vm604 = vcmp.lt.s32.totalorder %v75, %v601
    %vm605 = vcmp.lt.s32.totalorder %v76, %v601
    %vm606 = vcmp.lt.s32.totalorder %v77, %v601
    %vm607 = vcmp.lt.s32.totalorder %v78, %v601
    %vm608 = vcmp.lt.s32.totalorder %v79, %v601
    %vm609 = vcmp.lt.s32.totalorder %v80, %v601
    %vm610 = vcmp.lt.s32.totalorder %v81, %v601
    %vm611 = vcmp.lt.s32.totalorder %v82, %v601
    %vm612 = vcmp.lt.s32.totalorder %v83, %v601
    %vm613 = vcmp.lt.s32.totalorder %v84, %v601
    %v614 = vsel %vm602, %v589, 0.0
    %v615 = vsel %vm603, %v590, 0.0
    %v616 = vsel %vm604, %v591, 0.0
    %v617 = vsel %vm605, %v592, 0.0
    %v618 = vsel %vm606, %v593, 0.0
    %v619 = vsel %vm607, %v594, 0.0
    %v620 = vsel %vm608, %v595, 0.0
    %v621 = vsel %vm609, %v596, 0.0
    %v622 = vsel %vm610, %v597, 0.0
    %v623 = vsel %vm611, %v598, 0.0
    %v624 = vsel %vm612, %v599, 0.0
    %v625 = vsel %vm613, %v600, 0.0
    %v626 = vadd.f32 %v614, %v615
    %v627 = vadd.f32 %v626, %v616
    %v628 = vadd.f32 %v627, %v617
    %v629 = vadd.f32 %v628, %v618
    %v630 = vadd.f32 %v629, %v619
    %v631 = vadd.f32 %v630, %v620
    %v632 = vadd.f32 %v631, %v621
    %v633 = vadd.f32 %v632, %v622
    %v634 = vadd.f32 %v633, %v623
    %v635 = vadd.f32 %v634, %v624
    %v636 = vadd.f32 %v635, %v625
    %v637 = vadd.f32 %v636, 0.0
    %v638 = vld [vmem:[#allocation7] sm:$0xff]
    %v639 = vadd.f32 %v638, %v637
    %640 = vst [vmem:[#allocation7] sm:$0xff] %v639
    // Predicated region
    $region22: #{tpu_custom_call.1} parent=1 // pred_check
      _
    $region23: #{tpu_custom_call.1} parent=1 // pred_check_branch
      %642 = sbr.rel (0) target = $region25
    $region24: #{tpu_custom_call.1} parent=1 // pred_region
      %s644 = ssub.s32 128, 128
      %645 = vsyncadd [#allocation4], %s644
      %s647 = sshll.u32 [#allocation7], 4
      %s648 = int_to_ptr.vmem [resolvable:$true] %s647
      %650 = dma.vmem_to_hbm [thread:$0]  %s648, 128, %s2, [#allocation4]
    $region25: #{tpu_custom_call.1} parent=1 // pred_fallthru
      _
    // Predicated region
    $region26: #{tpu_custom_call.1} parent=1 // pred_check
      _
    $region27: #{tpu_custom_call.1} parent=1 // pred_check_branch
      %652 = sbr.rel (0) target = $region29
    $region28: #{tpu_custom_call.1} parent=1 // pred_region
      %653 = dma.done [#allocation4], 128
    $region29: #{tpu_custom_call.1} parent=1 // pred_fallthru
      _
    %654 = vsyncpa [#allocation3], 1
    %655 = vsyncpa [#allocation6], 1
    %656 = vsyncpa [#allocation4], 1

</llo_original>
